<compile_context>
chip_gen: v7x
topology: tpu7x:2x2x1
jax: 0.10.0
libtpu: 0.0.40
codegen_flags: <defaults>
</compile_context>

<pallas_src>
import functools

import jax
import jax.numpy as jnp
from jax.experimental import pallas as pl
from jax.experimental.pallas import tpu as pltpu


def _round_up(x, m):
    return ((x + m - 1) // m) * m


def _fused_colorization_kernel(
    x_ref,
    w9_ref, b9_ref, w10_ref, b10_ref, w11_ref, b11_ref,
    w12_ref, b12_ref, w13_ref, b13_ref,
    o_ref,
    *, compute_dtype,
):
    """Channel-major fused 5-layer 1x1-conv stack on one pixel tile.

    x_ref : (C0, tm)    activations: channels on sublanes, pixels on lanes
    w*_ref: (Cout, Cin) PyTorch-layout 1x1 conv weights (kernel dims squeezed)
    b*_ref: (Cout, 1)
    o_ref : (2, tm)     lane-dense, channel-major output tile
    """

    def layer(h, w_ref, b_ref, act):
        # MXU matmul; operands optionally cast (e.g. bf16 for v6e/v7x
        # throughput), accumulation always f32.  Bias/activation stay f32.
        y = jnp.dot(
            w_ref[...].astype(compute_dtype),
            h.astype(compute_dtype),
            preferred_element_type=jnp.float32,
        )
        y = y + b_ref[...]                 # (Cout, 1) lane-broadcast
        if act == "relu":
            return jnp.maximum(y, 0.0)
        return jax.nn.sigmoid(y)           # EUP

    h = x_ref[...]
    h = layer(h, w9_ref, b9_ref, "relu")
    h = layer(h, w10_ref, b10_ref, "relu")
    h = layer(h, w11_ref, b11_ref, "relu")
    h = layer(h, w12_ref, b12_ref, "relu")
    h = layer(h, w13_ref, b13_ref, "sigmoid")
    o_ref[...] = h.astype(o_ref.dtype)


def fused_conv_stack(x_cm, params, *, tm_cap=512, compute_dtype=jnp.float32):
    """Runs conv9..conv13 (1x1 convs + activations) on a channel-major slab.

    x_cm  : (C0, M) f32, M = N*H*W pixels on the lane axis.
    params: list of 5 (w, b) with w: (Cout, Cin), b: (Cout,).
    Returns (2, M) f32 (channel-major sigmoid output of conv13).
    """
    assert len(params) == 5
    C0, M = x_cm.shape

    # Pixel-tile size: multiple of 128 (lane width), capped at tm_cap; pad M so
    # the grid covers it exactly (no remainder drop, no whole-M fallback tile).
    tm = min(tm_cap, _round_up(M, 128))
    Mp = _round_up(M, tm)
    if Mp != M:
        x_cm = jnp.pad(x_cm, ((0, 0), (0, Mp - M)))

    args = [x_cm]
    in_specs = [pl.BlockSpec((C0, tm), lambda i: (0, i))]
    for (w, b) in params:
        cout, cin = w.shape
        args.append(w)
        args.append(b.reshape(cout, 1))
        # Grid-invariant whole-array blocks -> weights/biases stay VMEM resident.
        in_specs.append(pl.BlockSpec((cout, cin), lambda i: (0, 0)))
        in_specs.append(pl.BlockSpec((cout, 1), lambda i: (0, 0)))

    cout_final = params[-1][0].shape[0]
    kernel = functools.partial(_fused_colorization_kernel,
                               compute_dtype=compute_dtype)

    out = pl.pallas_call(
        kernel,
        out_shape=jax.ShapeDtypeStruct((cout_final, Mp), jnp.float32),
        grid_spec=pltpu.PrefetchScalarGridSpec(
            num_scalar_prefetch=0,
            grid=(Mp // tm,),
            in_specs=in_specs,
            out_specs=pl.BlockSpec((cout_final, tm), lambda i: (0, i)),
        ),
        compiler_params=pltpu.CompilerParams(
            dimension_semantics=("parallel",),
            vmem_limit_bytes=32 * 1024 * 1024,
        ),
    )(*args)

    return out[:, :M]


def colorization_forward(x_nchw, params, *, compute_dtype=jnp.float32):
    """Mirrors ColorizationNetwork.forward.  Input NCHW, output NCHW.

    Nearest 2x upsample commutes exactly with 1x1 convs / pointwise
    activations, so the three interleaved upsamples are hoisted to a single 8x
    nearest upsample after conv13; all convs run at the base resolution.
    Pass compute_dtype=jnp.bfloat16 for extra MXU throughput on v6e/v7x
    (accumulation stays f32); default f32 keeps exact PyTorch numerics.
    """
    N, C, H, W = x_nchw.shape
    x_cm = jnp.transpose(x_nchw, (1, 0, 2, 3)).reshape(C, N * H * W)
    y_cm = fused_conv_stack(x_cm, params, compute_dtype=compute_dtype)  # (2, M)
    y = jnp.transpose(y_cm.reshape(2, N, H, W), (1, 0, 2, 3))           # (N,2,H,W)
    # 2x . 2x . 2x nearest upsample == single 8x nearest upsample (pure
    # duplication) -- done once on the final small-channel tensor.
    y = jnp.repeat(y, 8, axis=2)
    y = jnp.repeat(y, 8, axis=3)
    return y


def init_params(key, net_divisor=1):
    ks = [256 // net_divisor, 128 // net_divisor, 64 // net_divisor,
          64 // net_divisor, 32 // net_divisor]
    # PyTorch Conv2d layout: weight (Cout, Cin) (1x1 kernel squeezed), bias (Cout,).
    dims = [(ks[1], ks[0]), (ks[2], ks[1]), (ks[3], ks[2]), (ks[4], ks[3]), (2, ks[4])]
    params = []
    for i, (cout, cin) in enumerate(dims):
        kw, kb = jax.random.split(jax.random.fold_in(key, i))
        bound = 1.0 / (cin ** 0.5)  # torch default fan-in scale
        w = jax.random.uniform(kw, (cout, cin), jnp.float32, -bound, bound)
        b = jax.random.uniform(kb, (cout,), jnp.float32, -bound, bound)
        params.append((w, b))
    return params


def reference_forward(x_nchw, params):
    """Plain-JAX reference following the original PyTorch op ordering exactly
    (convs and 2x upsamples interleaved), used to validate the hoist+fusion."""

    def conv1x1(x, w, b):
        y = jnp.einsum("nchw,oc->nohw", x, w,
                       precision=jax.lax.Precision.HIGHEST)
        return y + b[None, :, None, None]

    def up2(x):
        return jnp.repeat(jnp.repeat(x, 2, axis=2), 2, axis=3)

    (w9, b9), (w10, b10), (w11, b11), (w12, b12), (w13, b13) = params
    out = jax.nn.relu(conv1x1(x_nchw, w9, b9))
    out = up2(out)
    out = jax.nn.relu(conv1x1(out, w10, b10))
    out = jax.nn.relu(conv1x1(out, w11, b11))
    out = up2(out)
    out = jax.nn.relu(conv1x1(out, w12, b12))
    out = jax.nn.sigmoid(conv1x1(out, w13, b13))
    out = up2(out)
    return out


if __name__ == "__main__":
    key = jax.random.PRNGKey(0)
    kx, kp = jax.random.split(key)

    # Small input consistent with the module: conv9 expects 256 input channels.
    N, C, H, W = 2, 256, 8, 8
    x = jax.random.normal(kx, (N, C, H, W), jnp.float32)
    params = init_params(kp, net_divisor=1)

    fwd = jax.jit(colorization_forward)
    out = jax.block_until_ready(fwd(x, params))

    # Three 2x upsamples -> spatial x8, 2 output channels, sigmoid range.
    assert out.shape == (N, 2, H * 8, W * 8), out.shape
    assert bool(jnp.all(jnp.isfinite(out)))
    assert bool(jnp.all((out >= 0.0) & (out <= 1.0)))

    # Cross-check the hoisted/fused kernel against the literal op ordering.
    ref = reference_forward(x, params)
    max_err = float(jnp.max(jnp.abs(out - ref)))
    assert max_err < 2e-3, max_err

    print("KERNEL_OK")
</pallas_src>

<mosaic_0001>
module attributes {stable_mosaic.version = 11 : i64} {
  func.func @_fused_colorization_kernel(%arg0: i32, %arg1: memref<256x128xf32, #tpu.memory_space<vmem>>, %arg2: memref<128x256xf32, #tpu.memory_space<vmem>>, %arg3: memref<128x1xf32, #tpu.memory_space<vmem>>, %arg4: memref<64x128xf32, #tpu.memory_space<vmem>>, %arg5: memref<64x1xf32, #tpu.memory_space<vmem>>, %arg6: memref<64x64xf32, #tpu.memory_space<vmem>>, %arg7: memref<64x1xf32, #tpu.memory_space<vmem>>, %arg8: memref<32x64xf32, #tpu.memory_space<vmem>>, %arg9: memref<32x1xf32, #tpu.memory_space<vmem>>, %arg10: memref<2x32xf32, #tpu.memory_space<vmem>>, %arg11: memref<2x1xf32, #tpu.memory_space<vmem>>, %arg12: memref<2x128xf32, #tpu.memory_space<vmem>>) attributes {dimension_semantics = [#tpu.dimension_semantics<parallel>], iteration_bounds = array<i64: 1>, scalar_prefetch = 0 : i64, scratch_operands = 0 : i64, tpu.core_type = #tpu.core_type<tc>, window_params = [{transform_indices = @transform_0, window_bounds = array<i64: 256, 128>}, {pipeline_mode = #tpu.pipeline_mode<synchronous>, transform_indices = @transform_1, window_bounds = array<i64: 128, 256>}, {pipeline_mode = #tpu.pipeline_mode<synchronous>, transform_indices = @transform_2, window_bounds = array<i64: 128, 1>}, {pipeline_mode = #tpu.pipeline_mode<synchronous>, transform_indices = @transform_3, window_bounds = array<i64: 64, 128>}, {pipeline_mode = #tpu.pipeline_mode<synchronous>, transform_indices = @transform_4, window_bounds = array<i64: 64, 1>}, {pipeline_mode = #tpu.pipeline_mode<synchronous>, transform_indices = @transform_5, window_bounds = array<i64: 64, 64>}, {pipeline_mode = #tpu.pipeline_mode<synchronous>, transform_indices = @transform_6, window_bounds = array<i64: 64, 1>}, {pipeline_mode = #tpu.pipeline_mode<synchronous>, transform_indices = @transform_7, window_bounds = array<i64: 32, 64>}, {pipeline_mode = #tpu.pipeline_mode<synchronous>, transform_indices = @transform_8, window_bounds = array<i64: 32, 1>}, {pipeline_mode = #tpu.pipeline_mode<synchronous>, transform_indices = @transform_9, window_bounds = array<i64: 2, 32>}, {pipeline_mode = #tpu.pipeline_mode<synchronous>, transform_indices = @transform_10, window_bounds = array<i64: 2, 1>}, {transform_indices = @transform_11, window_bounds = array<i64: 2, 128>}]} {
    %c0 = arith.constant 0 : index
    %c0_0 = arith.constant 0 : index
    %0 = vector.load %arg1[%c0, %c0_0] : memref<256x128xf32, #tpu.memory_space<vmem>>, vector<256x128xf32>
    %c0_1 = arith.constant 0 : index
    %c0_2 = arith.constant 0 : index
    %1 = vector.load %arg2[%c0_1, %c0_2] : memref<128x256xf32, #tpu.memory_space<vmem>>, vector<128x256xf32>
    %cst = arith.constant dense<0.000000e+00> : vector<128x128xf32>
    %2 = tpu.matmul %1, %0, %cst {dimension_numbers = #tpu.dot_dimension_numbers<[1], [0], [0], [1], [0, 0, 1, 1], [], []>} : vector<128x256xf32>, vector<256x128xf32>, vector<128x128xf32> -> vector<128x128xf32>
    %c0_3 = arith.constant 0 : index
    %c0_4 = arith.constant 0 : index
    %3 = vector.load %arg3[%c0_3, %c0_4] : memref<128x1xf32, #tpu.memory_space<vmem>>, vector<128x1xf32>
    %4 = vector.broadcast %3 : vector<128x1xf32> to vector<128x128xf32>
    %5 = arith.addf %2, %4 : vector<128x128xf32>
    %cst_5 = arith.constant 0.000000e+00 : f32
    %6 = vector.broadcast %cst_5 : f32 to vector<128x128xf32>
    %7 = arith.maximumf %5, %6 : vector<128x128xf32>
    %c0_6 = arith.constant 0 : index
    %c0_7 = arith.constant 0 : index
    %8 = vector.load %arg4[%c0_6, %c0_7] : memref<64x128xf32, #tpu.memory_space<vmem>>, vector<64x128xf32>
    %cst_8 = arith.constant dense<0.000000e+00> : vector<64x128xf32>
    %9 = tpu.matmul %8, %7, %cst_8 {dimension_numbers = #tpu.dot_dimension_numbers<[1], [0], [0], [1], [0, 0, 1, 1], [], []>} : vector<64x128xf32>, vector<128x128xf32>, vector<64x128xf32> -> vector<64x128xf32>
    %c0_9 = arith.constant 0 : index
    %c0_10 = arith.constant 0 : index
    %10 = vector.load %arg5[%c0_9, %c0_10] : memref<64x1xf32, #tpu.memory_space<vmem>>, vector<64x1xf32>
    %11 = vector.broadcast %10 : vector<64x1xf32> to vector<64x128xf32>
    %12 = arith.addf %9, %11 : vector<64x128xf32>
    %cst_11 = arith.constant 0.000000e+00 : f32
    %13 = vector.broadcast %cst_11 : f32 to vector<64x128xf32>
    %14 = arith.maximumf %12, %13 : vector<64x128xf32>
    %c0_12 = arith.constant 0 : index
    %c0_13 = arith.constant 0 : index
    %15 = vector.load %arg6[%c0_12, %c0_13] : memref<64x64xf32, #tpu.memory_space<vmem>>, vector<64x64xf32>
    %cst_14 = arith.constant dense<0.000000e+00> : vector<64x128xf32>
    %16 = tpu.matmul %15, %14, %cst_14 {dimension_numbers = #tpu.dot_dimension_numbers<[1], [0], [0], [1], [0, 0, 1, 1], [], []>} : vector<64x64xf32>, vector<64x128xf32>, vector<64x128xf32> -> vector<64x128xf32>
    %c0_15 = arith.constant 0 : index
    %c0_16 = arith.constant 0 : index
    %17 = vector.load %arg7[%c0_15, %c0_16] : memref<64x1xf32, #tpu.memory_space<vmem>>, vector<64x1xf32>
    %18 = vector.broadcast %17 : vector<64x1xf32> to vector<64x128xf32>
    %19 = arith.addf %16, %18 : vector<64x128xf32>
    %cst_17 = arith.constant 0.000000e+00 : f32
    %20 = vector.broadcast %cst_17 : f32 to vector<64x128xf32>
    %21 = arith.maximumf %19, %20 : vector<64x128xf32>
    %c0_18 = arith.constant 0 : index
    %c0_19 = arith.constant 0 : index
    %22 = vector.load %arg8[%c0_18, %c0_19] : memref<32x64xf32, #tpu.memory_space<vmem>>, vector<32x64xf32>
    %cst_20 = arith.constant dense<0.000000e+00> : vector<32x128xf32>
    %23 = tpu.matmul %22, %21, %cst_20 {dimension_numbers = #tpu.dot_dimension_numbers<[1], [0], [0], [1], [0, 0, 1, 1], [], []>} : vector<32x64xf32>, vector<64x128xf32>, vector<32x128xf32> -> vector<32x128xf32>
    %c0_21 = arith.constant 0 : index
    %c0_22 = arith.constant 0 : index
    %24 = vector.load %arg9[%c0_21, %c0_22] : memref<32x1xf32, #tpu.memory_space<vmem>>, vector<32x1xf32>
    %25 = vector.broadcast %24 : vector<32x1xf32> to vector<32x128xf32>
    %26 = arith.addf %23, %25 : vector<32x128xf32>
    %cst_23 = arith.constant 0.000000e+00 : f32
    %27 = vector.broadcast %cst_23 : f32 to vector<32x128xf32>
    %28 = arith.maximumf %26, %27 : vector<32x128xf32>
    %c0_24 = arith.constant 0 : index
    %c0_25 = arith.constant 0 : index
    %29 = vector.load %arg10[%c0_24, %c0_25] : memref<2x32xf32, #tpu.memory_space<vmem>>, vector<2x32xf32>
    %cst_26 = arith.constant dense<0.000000e+00> : vector<2x128xf32>
    %30 = tpu.matmul %29, %28, %cst_26 {dimension_numbers = #tpu.dot_dimension_numbers<[1], [0], [0], [1], [0, 0, 1, 1], [], []>} : vector<2x32xf32>, vector<32x128xf32>, vector<2x128xf32> -> vector<2x128xf32>
    %c0_27 = arith.constant 0 : index
    %c0_28 = arith.constant 0 : index
    %31 = vector.load %arg11[%c0_27, %c0_28] : memref<2x1xf32, #tpu.memory_space<vmem>>, vector<2x1xf32>
    %32 = vector.broadcast %31 : vector<2x1xf32> to vector<2x128xf32>
    %33 = arith.addf %30, %32 : vector<2x128xf32>
    %34 = arith.negf %33 : vector<2x128xf32>
    %35 = math.exp %34 : vector<2x128xf32>
    %cst_29 = arith.constant 1.000000e+00 : f32
    %36 = vector.broadcast %cst_29 : f32 to vector<2x128xf32>
    %37 = arith.addf %36, %35 : vector<2x128xf32>
    %38 = arith.divf %36, %37 : vector<2x128xf32>
    %c0_30 = arith.constant 0 : index
    %c0_31 = arith.constant 0 : index
    %39 = vector.load %arg12[%c0_30, %c0_31] : memref<2x128xf32, #tpu.memory_space<vmem>>, vector<2x128xf32>
    tpu.vector_store %arg12[%c0_30, %c0_31], %38 {strides = array<i32>} : memref<2x128xf32, #tpu.memory_space<vmem>>, vector<2x128xf32>,
    return
  }
  func.func @transform_0(%arg0: i32) -> (i32, i32) {
    %c0_i32 = arith.constant 0 : i32
    %c0_i32_0 = arith.constant 0 : i32
    return %c0_i32, %arg0 : i32, i32
  }
  func.func @transform_1(%arg0: i32) -> (i32, i32) {
    %c0_i32 = arith.constant 0 : i32
    %c0_i32_0 = arith.constant 0 : i32
    %c0_i32_1 = arith.constant 0 : i32
    return %c0_i32, %c0_i32_0 : i32, i32
  }
  func.func @transform_2(%arg0: i32) -> (i32, i32) {
    %c0_i32 = arith.constant 0 : i32
    %c0_i32_0 = arith.constant 0 : i32
    %c0_i32_1 = arith.constant 0 : i32
    return %c0_i32, %c0_i32_0 : i32, i32
  }
  func.func @transform_3(%arg0: i32) -> (i32, i32) {
    %c0_i32 = arith.constant 0 : i32
    %c0_i32_0 = arith.constant 0 : i32
    %c0_i32_1 = arith.constant 0 : i32
    return %c0_i32, %c0_i32_0 : i32, i32
  }
  func.func @transform_4(%arg0: i32) -> (i32, i32) {
    %c0_i32 = arith.constant 0 : i32
    %c0_i32_0 = arith.constant 0 : i32
    %c0_i32_1 = arith.constant 0 : i32
    return %c0_i32, %c0_i32_0 : i32, i32
  }
  func.func @transform_5(%arg0: i32) -> (i32, i32) {
    %c0_i32 = arith.constant 0 : i32
    %c0_i32_0 = arith.constant 0 : i32
    %c0_i32_1 = arith.constant 0 : i32
    return %c0_i32, %c0_i32_0 : i32, i32
  }
  func.func @transform_6(%arg0: i32) -> (i32, i32) {
    %c0_i32 = arith.constant 0 : i32
    %c0_i32_0 = arith.constant 0 : i32
    %c0_i32_1 = arith.constant 0 : i32
    return %c0_i32, %c0_i32_0 : i32, i32
  }
  func.func @transform_7(%arg0: i32) -> (i32, i32) {
    %c0_i32 = arith.constant 0 : i32
    %c0_i32_0 = arith.constant 0 : i32
    %c0_i32_1 = arith.constant 0 : i32
    return %c0_i32, %c0_i32_0 : i32, i32
  }
  func.func @transform_8(%arg0: i32) -> (i32, i32) {
    %c0_i32 = arith.constant 0 : i32
    %c0_i32_0 = arith.constant 0 : i32
    %c0_i32_1 = arith.constant 0 : i32
    return %c0_i32, %c0_i32_0 : i32, i32
  }
  func.func @transform_9(%arg0: i32) -> (i32, i32) {
    %c0_i32 = arith.constant 0 : i32
    %c0_i32_0 = arith.constant 0 : i32
    %c0_i32_1 = arith.constant 0 : i32
    return %c0_i32, %c0_i32_0 : i32, i32
  }
  func.func @transform_10(%arg0: i32) -> (i32, i32) {
    %c0_i32 = arith.constant 0 : i32
    %c0_i32_0 = arith.constant 0 : i32
    %c0_i32_1 = arith.constant 0 : i32
    return %c0_i32, %c0_i32_0 : i32, i32
  }
  func.func @transform_11(%arg0: i32) -> (i32, i32) {
    %c0_i32 = arith.constant 0 : i32
    %c0_i32_0 = arith.constant 0 : i32
    return %c0_i32, %arg0 : i32, i32
  }
}

</mosaic_0001>

<llo_original>
// kernel: colorization_forward.1
$region0: #{colorization_forward.1}
  #allocation0 [shape = 'u32[]', space=smem, size = 0x4, offset = 0x4, fixed_abs, tag = 'smem constant byte address 0x4 - core index']
  #allocation1 [shape = 'u32[144,128]{1,0:T(1,128)}', space=vmem, size = 0x12000, scoped, tag = 'internal scratch']
  %s0 = inlined_call_operand.vmem [shape: f32[256,128], index: 0, kind: input, shape index: {}]
  %s1 = inlined_call_operand.vmem [shape: f32[128,256], index: 1, kind: input, shape index: {}]
  %s2 = inlined_call_operand.vmem [shape: f32[128,1], index: 2, kind: input, shape index: {}]
  %s3 = inlined_call_operand.vmem [shape: f32[64,128], index: 3, kind: input, shape index: {}]
  %s4 = inlined_call_operand.vmem [shape: f32[64,1], index: 4, kind: input, shape index: {}]
  %s5 = inlined_call_operand.vmem [shape: f32[64,64], index: 5, kind: input, shape index: {}]
  %s6 = inlined_call_operand.vmem [shape: f32[64,1], index: 6, kind: input, shape index: {}]
  %s7 = inlined_call_operand.vmem [shape: f32[32,64], index: 7, kind: input, shape index: {}]
  %s8 = inlined_call_operand.vmem [shape: f32[32,1], index: 8, kind: input, shape index: {}]
  %s9 = inlined_call_operand.vmem [shape: f32[2,32], index: 9, kind: input, shape index: {}]
  %s10 = inlined_call_operand.vmem [shape: f32[2,1], index: 10, kind: input, shape index: {}]
  %s11 = inlined_call_operand.vmem [shape: f32[2,128], index: 11, kind: output, shape index: {}]
  %s12 = sld [smem:[#allocation0]]
  $region54: #{colorization_forward.1} parent=0
    _
  %s14 = ssub.s32 1, %s12
  %s15 = scalar_select 0, %s14, %s12
  // Predicated region
  $region2: #{colorization_forward.1} parent=0 // pred_check
    _
  $region3: #{colorization_forward.1} parent=0 // pred_check_branch
    %17 = sbr.rel (0) target = $region5
  $region4: #{colorization_forward.1} parent=0 // pred_region
    _
  $region5: #{colorization_forward.1} parent=0 // pred_fallthru
    _
  // Predicated region
  $region6: #{colorization_forward.1} parent=0 // pred_check
    _
  $region7: #{colorization_forward.1} parent=0 // pred_check_branch
    %19 = sbr.rel (0) target = $region9
  $region8: #{colorization_forward.1} parent=0 // pred_region
    _
  $region9: #{colorization_forward.1} parent=0 // pred_fallthru
    _
  // Predicated region
  $region10: #{colorization_forward.1} parent=0 // pred_check
    _
  $region11: #{colorization_forward.1} parent=0 // pred_check_branch
    %21 = sbr.rel (0) target = $region13
  $region12: #{colorization_forward.1} parent=0 // pred_region
    _
  $region13: #{colorization_forward.1} parent=0 // pred_fallthru
    _
  // Predicated region
  $region14: #{colorization_forward.1} parent=0 // pred_check
    _
  $region15: #{colorization_forward.1} parent=0 // pred_check_branch
    %23 = sbr.rel (0) target = $region17
  $region16: #{colorization_forward.1} parent=0 // pred_region
    _
  $region17: #{colorization_forward.1} parent=0 // pred_fallthru
    _
  // Predicated region
  $region18: #{colorization_forward.1} parent=0 // pred_check
    _
  $region19: #{colorization_forward.1} parent=0 // pred_check_branch
    %25 = sbr.rel (0) target = $region21
  $region20: #{colorization_forward.1} parent=0 // pred_region
    _
  $region21: #{colorization_forward.1} parent=0 // pred_fallthru
    _
  // Predicated region
  $region22: #{colorization_forward.1} parent=0 // pred_check
    _
  $region23: #{colorization_forward.1} parent=0 // pred_check_branch
    %27 = sbr.rel (0) target = $region25
  $region24: #{colorization_forward.1} parent=0 // pred_region
    _
  $region25: #{colorization_forward.1} parent=0 // pred_fallthru
    _
  // Predicated region
  $region26: #{colorization_forward.1} parent=0 // pred_check
    _
  $region27: #{colorization_forward.1} parent=0 // pred_check_branch
    %29 = sbr.rel (0) target = $region29
  $region28: #{colorization_forward.1} parent=0 // pred_region
    _
  $region29: #{colorization_forward.1} parent=0 // pred_fallthru
    _
  // Predicated region
  $region30: #{colorization_forward.1} parent=0 // pred_check
    _
  $region31: #{colorization_forward.1} parent=0 // pred_check_branch
    %31 = sbr.rel (0) target = $region33
  $region32: #{colorization_forward.1} parent=0 // pred_region
    _
  $region33: #{colorization_forward.1} parent=0 // pred_fallthru
    _
  // Predicated region
  $region34: #{colorization_forward.1} parent=0 // pred_check
    _
  $region35: #{colorization_forward.1} parent=0 // pred_check_branch
    %33 = sbr.rel (0) target = $region37
  $region36: #{colorization_forward.1} parent=0 // pred_region
    _
  $region37: #{colorization_forward.1} parent=0 // pred_fallthru
    _
  // Predicated region
  $region38: #{colorization_forward.1} parent=0 // pred_check
    _
  $region39: #{colorization_forward.1} parent=0 // pred_check_branch
    %35 = sbr.rel (0) target = $region41
  $region40: #{colorization_forward.1} parent=0 // pred_region
    _
  $region41: #{colorization_forward.1} parent=0 // pred_fallthru
    _
  // Predicated region
  $region42: #{colorization_forward.1} parent=0 // pred_check
    _
  $region43: #{colorization_forward.1} parent=0 // pred_check_branch
    %37 = sbr.rel (0) target = $region45
  $region44: #{colorization_forward.1} parent=0 // pred_region
    _
  $region45: #{colorization_forward.1} parent=0 // pred_fallthru
    _
  %v38 = vld [vmem:[%s0] sm:$0xff]
  %v39 = vld [vmem:[%s0 + $0x8] sm:$0xff]
  %v40 = vld [vmem:[%s0 + $0x10] sm:$0xff]
  %v41 = vld [vmem:[%s0 + $0x18] sm:$0xff]
  %v42 = vld [vmem:[%s0 + $0x20] sm:$0xff]
  %v43 = vld [vmem:[%s0 + $0x28] sm:$0xff]
  %v44 = vld [vmem:[%s0 + $0x30] sm:$0xff]
  %v45 = vld [vmem:[%s0 + $0x38] sm:$0xff]
  %v46 = vld [vmem:[%s0 + $0x40] sm:$0xff]
  %v47 = vld [vmem:[%s0 + $0x48] sm:$0xff]
  %v48 = vld [vmem:[%s0 + $0x50] sm:$0xff]
  %v49 = vld [vmem:[%s0 + $0x58] sm:$0xff]
  %v50 = vld [vmem:[%s0 + $0x60] sm:$0xff]
  %v51 = vld [vmem:[%s0 + $0x68] sm:$0xff]
  %v52 = vld [vmem:[%s0 + $0x70] sm:$0xff]
  %v53 = vld [vmem:[%s0 + $0x78] sm:$0xff]
  %v54 = vld [vmem:[%s0 + $0x80] sm:$0xff]
  %v55 = vld [vmem:[%s0 + $0x88] sm:$0xff]
  %v56 = vld [vmem:[%s0 + $0x90] sm:$0xff]
  %v57 = vld [vmem:[%s0 + $0x98] sm:$0xff]
  %v58 = vld [vmem:[%s0 + $0xa0] sm:$0xff]
  %v59 = vld [vmem:[%s0 + $0xa8] sm:$0xff]
  %v60 = vld [vmem:[%s0 + $0xb0] sm:$0xff]
  %v61 = vld [vmem:[%s0 + $0xb8] sm:$0xff]
  %v62 = vld [vmem:[%s0 + $0xc0] sm:$0xff]
  %v63 = vld [vmem:[%s0 + $0xc8] sm:$0xff]
  %v64 = vld [vmem:[%s0 + $0xd0] sm:$0xff]
  %v65 = vld [vmem:[%s0 + $0xd8] sm:$0xff]
  %v66 = vld [vmem:[%s0 + $0xe0] sm:$0xff]
  %v67 = vld [vmem:[%s0 + $0xe8] sm:$0xff]
  %v68 = vld [vmem:[%s0 + $0xf0] sm:$0xff]
  %v69 = vld [vmem:[%s0 + $0xf8] sm:$0xff]
  %v70 = vld [vmem:[%s1] sm:$0xff]
  %v71 = vld [vmem:[%s1 + $0x8] sm:$0xff]
  %v72 = vld [vmem:[%s1 + $0x10] sm:$0xff]
  %v73 = vld [vmem:[%s1 + $0x18] sm:$0xff]
  %v74 = vld [vmem:[%s1 + $0x20] sm:$0xff]
  %v75 = vld [vmem:[%s1 + $0x28] sm:$0xff]
  %v76 = vld [vmem:[%s1 + $0x30] sm:$0xff]
  %v77 = vld [vmem:[%s1 + $0x38] sm:$0xff]
  %v78 = vld [vmem:[%s1 + $0x40] sm:$0xff]
  %v79 = vld [vmem:[%s1 + $0x48] sm:$0xff]
  %v80 = vld [vmem:[%s1 + $0x50] sm:$0xff]
  %v81 = vld [vmem:[%s1 + $0x58] sm:$0xff]
  %v82 = vld [vmem:[%s1 + $0x60] sm:$0xff]
  %v83 = vld [vmem:[%s1 + $0x68] sm:$0xff]
  %v84 = vld [vmem:[%s1 + $0x70] sm:$0xff]
  %v85 = vld [vmem:[%s1 + $0x78] sm:$0xff]
  %v86 = vld [vmem:[%s1 + $0x80] sm:$0xff]
  %v87 = vld [vmem:[%s1 + $0x88] sm:$0xff]
  %v88 = vld [vmem:[%s1 + $0x90] sm:$0xff]
  %v89 = vld [vmem:[%s1 + $0x98] sm:$0xff]
  %v90 = vld [vmem:[%s1 + $0xa0] sm:$0xff]
  %v91 = vld [vmem:[%s1 + $0xa8] sm:$0xff]
  %v92 = vld [vmem:[%s1 + $0xb0] sm:$0xff]
  %v93 = vld [vmem:[%s1 + $0xb8] sm:$0xff]
  %v94 = vld [vmem:[%s1 + $0xc0] sm:$0xff]
  %v95 = vld [vmem:[%s1 + $0xc8] sm:$0xff]
  %v96 = vld [vmem:[%s1 + $0xd0] sm:$0xff]
  %v97 = vld [vmem:[%s1 + $0xd8] sm:$0xff]
  %v98 = vld [vmem:[%s1 + $0xe0] sm:$0xff]
  %v99 = vld [vmem:[%s1 + $0xe8] sm:$0xff]
  %v100 = vld [vmem:[%s1 + $0xf0] sm:$0xff]
  %v101 = vld [vmem:[%s1 + $0xf8] sm:$0xff]
  %v102 = vld [vmem:[%s2] sm:$0xff]
  %v103 = vld [vmem:[%s2 + $0x8] sm:$0xff]
  %v104 = vld [vmem:[%s2 + $0x10] sm:$0xff]
  %v105 = vld [vmem:[%s2 + $0x18] sm:$0xff]
  %v106 = vld [vmem:[%s2 + $0x20] sm:$0xff]
  %v107 = vld [vmem:[%s2 + $0x28] sm:$0xff]
  %v108 = vld [vmem:[%s2 + $0x30] sm:$0xff]
  %v109 = vld [vmem:[%s2 + $0x38] sm:$0xff]
  %v110 = vld [vmem:[%s2 + $0x40] sm:$0xff]
  %v111 = vld [vmem:[%s2 + $0x48] sm:$0xff]
  %v112 = vld [vmem:[%s2 + $0x50] sm:$0xff]
  %v113 = vld [vmem:[%s2 + $0x58] sm:$0xff]
  %v114 = vld [vmem:[%s2 + $0x60] sm:$0xff]
  %v115 = vld [vmem:[%s2 + $0x68] sm:$0xff]
  %v116 = vld [vmem:[%s2 + $0x70] sm:$0xff]
  %v117 = vld [vmem:[%s2 + $0x78] sm:$0xff]
  %119 = vset.pattern.permute.xlu0 0
  %120 = vperm.xlu0 %119, %v102
  %v121 = vpop.permute.xlu0 %120
  %124 = vset.pattern.permute.xlu0 0
  %125 = vperm.xlu0 %124, %v103
  %v126 = vpop.permute.xlu0 %125
  %129 = vset.pattern.permute.xlu0 0
  %130 = vperm.xlu0 %129, %v104
  %v131 = vpop.permute.xlu0 %130
  %134 = vset.pattern.permute.xlu0 0
  %135 = vperm.xlu0 %134, %v105
  %v136 = vpop.permute.xlu0 %135
  %139 = vset.pattern.permute.xlu0 0
  %140 = vperm.xlu0 %139, %v106
  %v141 = vpop.permute.xlu0 %140
  %144 = vset.pattern.permute.xlu0 0
  %145 = vperm.xlu0 %144, %v107
  %v146 = vpop.permute.xlu0 %145
  %149 = vset.pattern.permute.xlu0 0
  %150 = vperm.xlu0 %149, %v108
  %v151 = vpop.permute.xlu0 %150
  %154 = vset.pattern.permute.xlu0 0
  %155 = vperm.xlu0 %154, %v109
  %v156 = vpop.permute.xlu0 %155
  %159 = vset.pattern.permute.xlu0 0
  %160 = vperm.xlu0 %159, %v110
  %v161 = vpop.permute.xlu0 %160
  %164 = vset.pattern.permute.xlu0 0
  %165 = vperm.xlu0 %164, %v111
  %v166 = vpop.permute.xlu0 %165
  %169 = vset.pattern.permute.xlu0 0
  %170 = vperm.xlu0 %169, %v112
  %v171 = vpop.permute.xlu0 %170
  %174 = vset.pattern.permute.xlu0 0
  %175 = vperm.xlu0 %174, %v113
  %v176 = vpop.permute.xlu0 %175
  %179 = vset.pattern.permute.xlu0 0
  %180 = vperm.xlu0 %179, %v114
  %v181 = vpop.permute.xlu0 %180
  %184 = vset.pattern.permute.xlu0 0
  %185 = vperm.xlu0 %184, %v115
  %v186 = vpop.permute.xlu0 %185
  %189 = vset.pattern.permute.xlu0 0
  %190 = vperm.xlu0 %189, %v116
  %v191 = vpop.permute.xlu0 %190
  %194 = vset.pattern.permute.xlu0 0
  %195 = vperm.xlu0 %194, %v117
  %v196 = vpop.permute.xlu0 %195
  %198 = vmatprep.subr.mxu0 0.0
  %199 = vmatpush1.msra.mxu0 %v38
  %200 = vmatprep.subr.mxu0 0.0
  %201 = vmatpush1.msra.mxu0 %v39
  %202 = vmatprep.subr.mxu0 0.0
  %203 = vmatpush1.msra.mxu0 %v40
  %204 = vmatprep.subr.mxu0 0.0
  %205 = vmatpush1.msra.mxu0 %v41
  %206 = vmatprep.subr.mxu0 0.0
  %207 = vmatpush1.msra.mxu0 %v42
  %208 = vmatprep.subr.mxu0 0.0
  %209 = vmatpush1.msra.mxu0 %v43
  %210 = vmatprep.subr.mxu0 0.0
  %211 = vmatpush1.msra.mxu0 %v44
  %212 = vmatprep.subr.mxu0 0.0
  %213 = vmatpush1.msra.mxu0 %v45
  %214 = vmatprep.subr.mxu0 0.0
  %215 = vmatpush1.msra.mxu0 %v46
  %216 = vmatprep.subr.mxu0 0.0
  %217 = vmatpush1.msra.mxu0 %v47
  %218 = vmatprep.subr.mxu0 0.0
  %219 = vmatpush1.msra.mxu0 %v48
  %220 = vmatprep.subr.mxu0 0.0
  %221 = vmatpush1.msra.mxu0 %v49
  %222 = vmatprep.subr.mxu0 0.0
  %223 = vmatpush1.msra.mxu0 %v50
  %224 = vmatprep.subr.mxu0 0.0
  %225 = vmatpush1.msra.mxu0 %v51
  %226 = vmatprep.subr.mxu0 0.0
  %227 = vmatpush1.msra.mxu0 %v52
  %228 = vmatprep.subr.mxu0 0.0
  %229 = vmatpush1.msra.mxu0 %v53
  %230 = vmatprep.subr.mxu0 0.0
  %231 = vmatpush1.msra.mxu0 %v54
  %232 = vmatprep.subr.mxu0 0.0
  %233 = vmatpush1.msra.mxu0 %v55
  %234 = vmatprep.subr.mxu0 0.0
  %235 = vmatpush1.msra.mxu0 %v56
  %236 = vmatprep.subr.mxu0 0.0
  %237 = vmatpush1.msra.mxu0 %v57
  %238 = vmatprep.subr.mxu0 0.0
  %239 = vmatpush1.msra.mxu0 %v58
  %240 = vmatprep.subr.mxu0 0.0
  %241 = vmatpush1.msra.mxu0 %v59
  %242 = vmatprep.subr.mxu0 0.0
  %243 = vmatpush1.msra.mxu0 %v60
  %244 = vmatprep.subr.mxu0 0.0
  %245 = vmatpush1.msra.mxu0 %v61
  %246 = vmatprep.subr.mxu0 0.0
  %247 = vmatpush1.msra.mxu0 %v62
  %248 = vmatprep.subr.mxu0 0.0
  %249 = vmatpush1.msra.mxu0 %v63
  %250 = vmatprep.subr.mxu0 0.0
  %251 = vmatpush1.msra.mxu0 %v64
  %252 = vmatprep.subr.mxu0 0.0
  %253 = vmatpush1.msra.mxu0 %v65
  %254 = vmatprep.subr.mxu0 0.0
  %255 = vmatpush1.msra.mxu0 %v66
  %256 = vmatprep.subr.mxu0 0.0
  %257 = vmatpush1.msra.mxu0 %v67
  %258 = vmatprep.subr.mxu0 0.0
  %259 = vmatpush1.msra.mxu0 %v68
  %260 = vmatprep.subr.mxu0 0.0
  %261 = vmatpush1.msra.mxu0 %v69
  %262 = vmatprep.mubr.f32.mxu0 %v71
  %263 = vmatmul.mubr.f32.gmra.mrb[0].mxu0 %v70
  %v264 = vpop.f32.mrb[0].mxu0
  %v265 = vadd.f32 %v121, %v264
  %v266 = vpop.f32.mrb[0].mxu0
  %267 = vmatprep.mubr.f32.mxu0 %v73
  %268 = vmatmul.mubr.f32.gmra.mrb[0].mxu0 %v72
  %v269 = vpop.f32.mrb[0].mxu0
  %v270 = vadd.f32 %v126, %v269
  %v271 = vpop.f32.mrb[0].mxu0
  %272 = vmatprep.mubr.f32.mxu0 %v75
  %273 = vmatmul.mubr.f32.gmra.mrb[0].mxu0 %v74
  %v274 = vpop.f32.mrb[0].mxu0
  %v275 = vadd.f32 %v131, %v274
  %v276 = vpop.f32.mrb[0].mxu0
  %277 = vmatprep.mubr.f32.mxu0 %v77
  %278 = vmatmul.mubr.f32.gmra.mrb[0].mxu0 %v76
  %v279 = vpop.f32.mrb[0].mxu0
  %v280 = vadd.f32 %v136, %v279
  %v281 = vpop.f32.mrb[0].mxu0
  %282 = vmatprep.mubr.f32.mxu0 %v79
  %283 = vmatmul.mubr.f32.gmra.mrb[0].mxu0 %v78
  %v284 = vpop.f32.mrb[0].mxu0
  %v285 = vadd.f32 %v141, %v284
  %v286 = vpop.f32.mrb[0].mxu0
  %287 = vmatprep.mubr.f32.mxu0 %v81
  %288 = vmatmul.mubr.f32.gmra.mrb[0].mxu0 %v80
  %v289 = vpop.f32.mrb[0].mxu0
  %v290 = vadd.f32 %v146, %v289
  %v291 = vpop.f32.mrb[0].mxu0
  %292 = vmatprep.mubr.f32.mxu0 %v83
  %293 = vmatmul.mubr.f32.gmra.mrb[0].mxu0 %v82
  %v294 = vpop.f32.mrb[0].mxu0
  %v295 = vadd.f32 %v151, %v294
  %v296 = vpop.f32.mrb[0].mxu0
  %297 = vmatprep.mubr.f32.mxu0 %v85
  %298 = vmatmul.mubr.f32.gmra.mrb[0].mxu0 %v84
  %v299 = vpop.f32.mrb[0].mxu0
  %v300 = vadd.f32 %v156, %v299
  %v301 = vpop.f32.mrb[0].mxu0
  %302 = vmatprep.mubr.f32.mxu0 %v87
  %303 = vmatmul.mubr.f32.gmra.mrb[0].mxu0 %v86
  %v304 = vpop.f32.mrb[0].mxu0
  %v305 = vadd.f32 %v161, %v304
  %v306 = vpop.f32.mrb[0].mxu0
  %307 = vmatprep.mubr.f32.mxu0 %v89
  %308 = vmatmul.mubr.f32.gmra.mrb[0].mxu0 %v88
  %v309 = vpop.f32.mrb[0].mxu0
  %v310 = vadd.f32 %v166, %v309
  %v311 = vpop.f32.mrb[0].mxu0
  %312 = vmatprep.mubr.f32.mxu0 %v91
  %313 = vmatmul.mubr.f32.gmra.mrb[0].mxu0 %v90
  %v314 = vpop.f32.mrb[0].mxu0
  %v315 = vadd.f32 %v171, %v314
  %v316 = vpop.f32.mrb[0].mxu0
  %317 = vmatprep.mubr.f32.mxu0 %v93
  %318 = vmatmul.mubr.f32.gmra.mrb[0].mxu0 %v92
  %v319 = vpop.f32.mrb[0].mxu0
  %v320 = vadd.f32 %v176, %v319
  %v321 = vpop.f32.mrb[0].mxu0
  %322 = vmatprep.mubr.f32.mxu0 %v95
  %323 = vmatmul.mubr.f32.gmra.mrb[0].mxu0 %v94
  %v324 = vpop.f32.mrb[0].mxu0
  %v325 = vadd.f32 %v181, %v324
  %v326 = vpop.f32.mrb[0].mxu0
  %327 = vmatprep.mubr.f32.mxu0 %v97
  %328 = vmatmul.mubr.f32.gmra.mrb[0].mxu0 %v96
  %v329 = vpop.f32.mrb[0].mxu0
  %v330 = vadd.f32 %v186, %v329
  %v331 = vpop.f32.mrb[0].mxu0
  %332 = vmatprep.mubr.f32.mxu0 %v99
  %333 = vmatmul.mubr.f32.gmra.mrb[0].mxu0 %v98
  %v334 = vpop.f32.mrb[0].mxu0
  %v335 = vadd.f32 %v191, %v334
  %v336 = vpop.f32.mrb[0].mxu0
  %337 = vmatprep.mubr.f32.mxu0 %v101
  %338 = vmatmul.mubr.f32.gmra.mrb[0].mxu0 %v100
  %v339 = vpop.f32.mrb[0].mxu0
  %v340 = vadd.f32 %v196, %v339
  %v341 = vpop.f32.mrb[0].mxu0
  %342 = vdwg.mxu0
  %v343 = vmax.f32 %v265, 0.0
  %v344 = vmax.f32 %v270, 0.0
  %v345 = vmax.f32 %v275, 0.0
  %v346 = vmax.f32 %v280, 0.0
  %v347 = vmax.f32 %v285, 0.0
  %v348 = vmax.f32 %v290, 0.0
  %v349 = vmax.f32 %v295, 0.0
  %v350 = vmax.f32 %v300, 0.0
  %v351 = vmax.f32 %v305, 0.0
  %v352 = vmax.f32 %v310, 0.0
  %v353 = vmax.f32 %v315, 0.0
  %v354 = vmax.f32 %v320, 0.0
  %v355 = vmax.f32 %v325, 0.0
  %v356 = vmax.f32 %v330, 0.0
  %v357 = vmax.f32 %v335, 0.0
  %v358 = vmax.f32 %v340, 0.0
  %v359 = vld [vmem:[%s3] sm:$0xff]
  %v360 = vld [vmem:[%s3 + $0x8] sm:$0xff]
  %v361 = vld [vmem:[%s3 + $0x10] sm:$0xff]
  %v362 = vld [vmem:[%s3 + $0x18] sm:$0xff]
  %v363 = vld [vmem:[%s3 + $0x20] sm:$0xff]
  %v364 = vld [vmem:[%s3 + $0x28] sm:$0xff]
  %v365 = vld [vmem:[%s3 + $0x30] sm:$0xff]
  %v366 = vld [vmem:[%s3 + $0x38] sm:$0xff]
  %v367 = vld [vmem:[%s4] sm:$0xff]
  %v368 = vld [vmem:[%s4 + $0x8] sm:$0xff]
  %v369 = vld [vmem:[%s4 + $0x10] sm:$0xff]
  %v370 = vld [vmem:[%s4 + $0x18] sm:$0xff]
  %v371 = vld [vmem:[%s4 + $0x20] sm:$0xff]
  %v372 = vld [vmem:[%s4 + $0x28] sm:$0xff]
  %v373 = vld [vmem:[%s4 + $0x30] sm:$0xff]
  %v374 = vld [vmem:[%s4 + $0x38] sm:$0xff]
  %376 = vset.pattern.permute.xlu0 0
  %377 = vperm.xlu0 %376, %v367
  %v378 = vpop.permute.xlu0 %377
  %381 = vset.pattern.permute.xlu0 0
  %382 = vperm.xlu0 %381, %v368
  %v383 = vpop.permute.xlu0 %382
  %386 = vset.pattern.permute.xlu0 0
  %387 = vperm.xlu0 %386, %v369
  %v388 = vpop.permute.xlu0 %387
  %391 = vset.pattern.permute.xlu0 0
  %392 = vperm.xlu0 %391, %v370
  %v393 = vpop.permute.xlu0 %392
  %396 = vset.pattern.permute.xlu0 0
  %397 = vperm.xlu0 %396, %v371
  %v398 = vpop.permute.xlu0 %397
  %401 = vset.pattern.permute.xlu0 0
  %402 = vperm.xlu0 %401, %v372
  %v403 = vpop.permute.xlu0 %402
  %406 = vset.pattern.permute.xlu0 0
  %407 = vperm.xlu0 %406, %v373
  %v408 = vpop.permute.xlu0 %407
  %411 = vset.pattern.permute.xlu0 0
  %412 = vperm.xlu0 %411, %v374
  %v413 = vpop.permute.xlu0 %412
  %415 = vmatprep.subr.mxu0 0.0
  %416 = vmatpush1.msra.mxu0 %v343
  %417 = vmatprep.subr.mxu0 0.0
  %418 = vmatpush1.msra.mxu0 %v344
  %419 = vmatprep.subr.mxu0 0.0
  %420 = vmatpush1.msra.mxu0 %v345
  %421 = vmatprep.subr.mxu0 0.0
  %422 = vmatpush1.msra.mxu0 %v346
  %423 = vmatprep.subr.mxu0 0.0
  %424 = vmatpush1.msra.mxu0 %v347
  %425 = vmatprep.subr.mxu0 0.0
  %426 = vmatpush1.msra.mxu0 %v348
  %427 = vmatprep.subr.mxu0 0.0
  %428 = vmatpush1.msra.mxu0 %v349
  %429 = vmatprep.subr.mxu0 0.0
  %430 = vmatpush1.msra.mxu0 %v350
  %431 = vmatprep.subr.mxu0 0.0
  %432 = vmatpush1.msra.mxu0 %v351
  %433 = vmatprep.subr.mxu0 0.0
  %434 = vmatpush1.msra.mxu0 %v352
  %435 = vmatprep.subr.mxu0 0.0
  %436 = vmatpush1.msra.mxu0 %v353
  %437 = vmatprep.subr.mxu0 0.0
  %438 = vmatpush1.msra.mxu0 %v354
  %439 = vmatprep.subr.mxu0 0.0
  %440 = vmatpush1.msra.mxu0 %v355
  %441 = vmatprep.subr.mxu0 0.0
  %442 = vmatpush1.msra.mxu0 %v356
  %443 = vmatprep.subr.mxu0 0.0
  %444 = vmatpush1.msra.mxu0 %v357
  %445 = vmatprep.subr.mxu0 0.0
  %446 = vmatpush1.msra.mxu0 %v358
  %447 = vmatprep.subr.mxu0 0.0
  %448 = vmatpush1.msra.mxu0 0.0
  %449 = vmatprep.subr.mxu0 0.0
  %450 = vmatpush1.msra.mxu0 0.0
  %451 = vmatprep.subr.mxu0 0.0
  %452 = vmatpush1.msra.mxu0 0.0
  %453 = vmatprep.subr.mxu0 0.0
  %454 = vmatpush1.msra.mxu0 0.0
  %455 = vmatprep.subr.mxu0 0.0
  %456 = vmatpush1.msra.mxu0 0.0
  %457 = vmatprep.subr.mxu0 0.0
  %458 = vmatpush1.msra.mxu0 0.0
  %459 = vmatprep.subr.mxu0 0.0
  %460 = vmatpush1.msra.mxu0 0.0
  %461 = vmatprep.subr.mxu0 0.0
  %462 = vmatpush1.msra.mxu0 0.0
  %463 = vmatprep.subr.mxu0 0.0
  %464 = vmatpush1.msra.mxu0 0.0
  %465 = vmatprep.subr.mxu0 0.0
  %466 = vmatpush1.msra.mxu0 0.0
  %467 = vmatprep.subr.mxu0 0.0
  %468 = vmatpush1.msra.mxu0 0.0
  %469 = vmatprep.subr.mxu0 0.0
  %470 = vmatpush1.msra.mxu0 0.0
  %471 = vmatprep.subr.mxu0 0.0
  %472 = vmatpush1.msra.mxu0 0.0
  %473 = vmatprep.subr.mxu0 0.0
  %474 = vmatpush1.msra.mxu0 0.0
  %475 = vmatprep.subr.mxu0 0.0
  %476 = vmatpush1.msra.mxu0 0.0
  %477 = vmatprep.subr.mxu0 0.0
  %478 = vmatpush1.msra.mxu0 0.0
  %479 = vmatprep.mubr.f32.mxu0 0.0
  %480 = vmatmul.mubr.f32.gmra.mrb[0].mxu0 %v359
  %v481 = vpop.f32.mrb[0].mxu0
  %v482 = vadd.f32 %v378, %v481
  %v483 = vpop.f32.mrb[0].mxu0
  %484 = vmatprep.mubr.f32.mxu0 0.0
  %485 = vmatmul.mubr.f32.gmra.mrb[0].mxu0 %v360
  %v486 = vpop.f32.mrb[0].mxu0
  %v487 = vadd.f32 %v383, %v486
  %v488 = vpop.f32.mrb[0].mxu0
  %489 = vmatprep.mubr.f32.mxu0 0.0
  %490 = vmatmul.mubr.f32.gmra.mrb[0].mxu0 %v361
  %v491 = vpop.f32.mrb[0].mxu0
  %v492 = vadd.f32 %v388, %v491
  %v493 = vpop.f32.mrb[0].mxu0
  %494 = vmatprep.mubr.f32.mxu0 0.0
  %495 = vmatmul.mubr.f32.gmra.mrb[0].mxu0 %v362
  %v496 = vpop.f32.mrb[0].mxu0
  %v497 = vadd.f32 %v393, %v496
  %v498 = vpop.f32.mrb[0].mxu0
  %499 = vmatprep.mubr.f32.mxu0 0.0
  %500 = vmatmul.mubr.f32.gmra.mrb[0].mxu0 %v363
  %v501 = vpop.f32.mrb[0].mxu0
  %v502 = vadd.f32 %v398, %v501
  %v503 = vpop.f32.mrb[0].mxu0
  %504 = vmatprep.mubr.f32.mxu0 0.0
  %505 = vmatmul.mubr.f32.gmra.mrb[0].mxu0 %v364
  %v506 = vpop.f32.mrb[0].mxu0
  %v507 = vadd.f32 %v403, %v506
  %v508 = vpop.f32.mrb[0].mxu0
  %509 = vmatprep.mubr.f32.mxu0 0.0
  %510 = vmatmul.mubr.f32.gmra.mrb[0].mxu0 %v365
  %v511 = vpop.f32.mrb[0].mxu0
  %v512 = vadd.f32 %v408, %v511
  %v513 = vpop.f32.mrb[0].mxu0
  %514 = vmatprep.mubr.f32.mxu0 0.0
  %515 = vmatmul.mubr.f32.gmra.mrb[0].mxu0 %v366
  %v516 = vpop.f32.mrb[0].mxu0
  %v517 = vadd.f32 %v413, %v516
  %v518 = vpop.f32.mrb[0].mxu0
  %519 = vdwg.mxu0
  %v520 = vmax.f32 %v482, 0.0
  %v521 = vmax.f32 %v487, 0.0
  %v522 = vmax.f32 %v492, 0.0
  %v523 = vmax.f32 %v497, 0.0
  %v524 = vmax.f32 %v502, 0.0
  %v525 = vmax.f32 %v507, 0.0
  %v526 = vmax.f32 %v512, 0.0
  %v527 = vmax.f32 %v517, 0.0
  %v528 = vld [vmem:[%s5] sm:$0xff]
  %v529 = vld [vmem:[%s5 + $0x8] sm:$0xff]
  %v530 = vld [vmem:[%s5 + $0x10] sm:$0xff]
  %v531 = vld [vmem:[%s5 + $0x18] sm:$0xff]
  %v532 = vld [vmem:[%s5 + $0x20] sm:$0xff]
  %v533 = vld [vmem:[%s5 + $0x28] sm:$0xff]
  %v534 = vld [vmem:[%s5 + $0x30] sm:$0xff]
  %v535 = vld [vmem:[%s5 + $0x38] sm:$0xff]
  %v536 = vld [vmem:[%s6] sm:$0xff]
  %v537 = vld [vmem:[%s6 + $0x8] sm:$0xff]
  %v538 = vld [vmem:[%s6 + $0x10] sm:$0xff]
  %v539 = vld [vmem:[%s6 + $0x18] sm:$0xff]
  %v540 = vld [vmem:[%s6 + $0x20] sm:$0xff]
  %v541 = vld [vmem:[%s6 + $0x28] sm:$0xff]
  %v542 = vld [vmem:[%s6 + $0x30] sm:$0xff]
  %v543 = vld [vmem:[%s6 + $0x38] sm:$0xff]
  %545 = vset.pattern.permute.xlu0 0
  %546 = vperm.xlu0 %545, %v536
  %v547 = vpop.permute.xlu0 %546
  %550 = vset.pattern.permute.xlu0 0
  %551 = vperm.xlu0 %550, %v537
  %v552 = vpop.permute.xlu0 %551
  %555 = vset.pattern.permute.xlu0 0
  %556 = vperm.xlu0 %555, %v538
  %v557 = vpop.permute.xlu0 %556
  %560 = vset.pattern.permute.xlu0 0
  %561 = vperm.xlu0 %560, %v539
  %v562 = vpop.permute.xlu0 %561
  %565 = vset.pattern.permute.xlu0 0
  %566 = vperm.xlu0 %565, %v540
  %v567 = vpop.permute.xlu0 %566
  %570 = vset.pattern.permute.xlu0 0
  %571 = vperm.xlu0 %570, %v541
  %v572 = vpop.permute.xlu0 %571
  %575 = vset.pattern.permute.xlu0 0
  %576 = vperm.xlu0 %575, %v542
  %v577 = vpop.permute.xlu0 %576
  %580 = vset.pattern.permute.xlu0 0
  %581 = vperm.xlu0 %580, %v543
  %v582 = vpop.permute.xlu0 %581
  %vm584 = vcmask 523264
  %v586 = vsel %vm584, %v528, 0
  %v589 = vsel %vm584, %v529, 0
  %v592 = vsel %vm584, %v530, 0
  %v595 = vsel %vm584, %v531, 0
  %v598 = vsel %vm584, %v532, 0
  %v601 = vsel %vm584, %v533, 0
  %v604 = vsel %vm584, %v534, 0
  %v607 = vsel %vm584, %v535, 0
  %609 = vmatprep.subr.mxu0 0.0
  %610 = vmatpush1.msra.mxu0 %v520
  %611 = vmatprep.subr.mxu0 0.0
  %612 = vmatpush1.msra.mxu0 %v521
  %613 = vmatprep.subr.mxu0 0.0
  %614 = vmatpush1.msra.mxu0 %v522
  %615 = vmatprep.subr.mxu0 0.0
  %616 = vmatpush1.msra.mxu0 %v523
  %617 = vmatprep.subr.mxu0 0.0
  %618 = vmatpush1.msra.mxu0 %v524
  %619 = vmatprep.subr.mxu0 0.0
  %620 = vmatpush1.msra.mxu0 %v525
  %621 = vmatprep.subr.mxu0 0.0
  %622 = vmatpush1.msra.mxu0 %v526
  %623 = vmatprep.subr.mxu0 0.0
  %624 = vmatpush1.msra.mxu0 %v527
  %625 = vmatprep.subr.mxu0 0.0
  %626 = vmatpush1.msra.mxu0 0.0
  %627 = vmatprep.subr.mxu0 0.0
  %628 = vmatpush1.msra.mxu0 0.0
  %629 = vmatprep.subr.mxu0 0.0
  %630 = vmatpush1.msra.mxu0 0.0
  %631 = vmatprep.subr.mxu0 0.0
  %632 = vmatpush1.msra.mxu0 0.0
  %633 = vmatprep.subr.mxu0 0.0
  %634 = vmatpush1.msra.mxu0 0.0
  %635 = vmatprep.subr.mxu0 0.0
  %636 = vmatpush1.msra.mxu0 0.0
  %637 = vmatprep.subr.mxu0 0.0
  %638 = vmatpush1.msra.mxu0 0.0
  %639 = vmatprep.subr.mxu0 0.0
  %640 = vmatpush1.msra.mxu0 0.0
  %641 = vmatprep.subr.mxu0 0.0
  %642 = vmatpush1.msra.mxu0 0.0
  %643 = vmatprep.subr.mxu0 0.0
  %644 = vmatpush1.msra.mxu0 0.0
  %645 = vmatprep.subr.mxu0 0.0
  %646 = vmatpush1.msra.mxu0 0.0
  %647 = vmatprep.subr.mxu0 0.0
  %648 = vmatpush1.msra.mxu0 0.0
  %649 = vmatprep.subr.mxu0 0.0
  %650 = vmatpush1.msra.mxu0 0.0
  %651 = vmatprep.subr.mxu0 0.0
  %652 = vmatpush1.msra.mxu0 0.0
  %653 = vmatprep.subr.mxu0 0.0
  %654 = vmatpush1.msra.mxu0 0.0
  %655 = vmatprep.subr.mxu0 0.0
  %656 = vmatpush1.msra.mxu0 0.0
  %657 = vmatprep.subr.mxu0 0.0
  %658 = vmatpush1.msra.mxu0 0.0
  %659 = vmatprep.subr.mxu0 0.0
  %660 = vmatpush1.msra.mxu0 0.0
  %661 = vmatprep.subr.mxu0 0.0
  %662 = vmatpush1.msra.mxu0 0.0
  %663 = vmatprep.subr.mxu0 0.0
  %664 = vmatpush1.msra.mxu0 0.0
  %665 = vmatprep.subr.mxu0 0.0
  %666 = vmatpush1.msra.mxu0 0.0
  %667 = vmatprep.subr.mxu0 0.0
  %668 = vmatpush1.msra.mxu0 0.0
  %669 = vmatprep.subr.mxu0 0.0
  %670 = vmatpush1.msra.mxu0 0.0
  %671 = vmatprep.subr.mxu0 0.0
  %672 = vmatpush1.msra.mxu0 0.0
  %673 = vmatprep.mubr.f32.mxu0 0.0
  %674 = vmatmul.mubr.f32.gmra.mrb[0].mxu0 %v586
  %v675 = vpop.f32.mrb[0].mxu0
  %v676 = vadd.f32 %v547, %v675
  %v677 = vpop.f32.mrb[0].mxu0
  %678 = vmatprep.mubr.f32.mxu0 0.0
  %679 = vmatmul.mubr.f32.gmra.mrb[0].mxu0 %v589
  %v680 = vpop.f32.mrb[0].mxu0
  %v681 = vadd.f32 %v552, %v680
  %v682 = vpop.f32.mrb[0].mxu0
  %683 = vmatprep.mubr.f32.mxu0 0.0
  %684 = vmatmul.mubr.f32.gmra.mrb[0].mxu0 %v592
  %v685 = vpop.f32.mrb[0].mxu0
  %v686 = vadd.f32 %v557, %v685
  %v687 = vpop.f32.mrb[0].mxu0
  %688 = vmatprep.mubr.f32.mxu0 0.0
  %689 = vmatmul.mubr.f32.gmra.mrb[0].mxu0 %v595
  %v690 = vpop.f32.mrb[0].mxu0
  %v691 = vadd.f32 %v562, %v690
  %v692 = vpop.f32.mrb[0].mxu0
  %693 = vmatprep.mubr.f32.mxu0 0.0
  %694 = vmatmul.mubr.f32.gmra.mrb[0].mxu0 %v598
  %v695 = vpop.f32.mrb[0].mxu0
  %v696 = vadd.f32 %v567, %v695
  %v697 = vpop.f32.mrb[0].mxu0
  %698 = vmatprep.mubr.f32.mxu0 0.0
  %699 = vmatmul.mubr.f32.gmra.mrb[0].mxu0 %v601
  %v700 = vpop.f32.mrb[0].mxu0
  %v701 = vadd.f32 %v572, %v700
  %v702 = vpop.f32.mrb[0].mxu0
  %703 = vmatprep.mubr.f32.mxu0 0.0
  %704 = vmatmul.mubr.f32.gmra.mrb[0].mxu0 %v604
  %v705 = vpop.f32.mrb[0].mxu0
  %v706 = vadd.f32 %v577, %v705
  %v707 = vpop.f32.mrb[0].mxu0
  %708 = vmatprep.mubr.f32.mxu0 0.0
  %709 = vmatmul.mubr.f32.gmra.mrb[0].mxu0 %v607
  %v710 = vpop.f32.mrb[0].mxu0
  %v711 = vadd.f32 %v582, %v710
  %v712 = vpop.f32.mrb[0].mxu0
  %713 = vdwg.mxu0
  %v714 = vmax.f32 %v676, 0.0
  %v715 = vmax.f32 %v681, 0.0
  %v716 = vmax.f32 %v686, 0.0
  %v717 = vmax.f32 %v691, 0.0
  %v718 = vmax.f32 %v696, 0.0
  %v719 = vmax.f32 %v701, 0.0
  %v720 = vmax.f32 %v706, 0.0
  %v721 = vmax.f32 %v711, 0.0
  %v722 = vld [vmem:[%s7] sm:$0xff]
  %v723 = vld [vmem:[%s7 + $0x8] sm:$0xff]
  %v724 = vld [vmem:[%s7 + $0x10] sm:$0xff]
  %v725 = vld [vmem:[%s7 + $0x18] sm:$0xff]
  %v726 = vld [vmem:[%s8] sm:$0xff]
  %v727 = vld [vmem:[%s8 + $0x8] sm:$0xff]
  %v728 = vld [vmem:[%s8 + $0x10] sm:$0xff]
  %v729 = vld [vmem:[%s8 + $0x18] sm:$0xff]
  %731 = vset.pattern.permute.xlu0 0
  %732 = vperm.xlu0 %731, %v726
  %v733 = vpop.permute.xlu0 %732
  %736 = vset.pattern.permute.xlu0 0
  %737 = vperm.xlu0 %736, %v727
  %v738 = vpop.permute.xlu0 %737
  %741 = vset.pattern.permute.xlu0 0
  %742 = vperm.xlu0 %741, %v728
  %v743 = vpop.permute.xlu0 %742
  %746 = vset.pattern.permute.xlu0 0
  %747 = vperm.xlu0 %746, %v729
  %v748 = vpop.permute.xlu0 %747
  %v751 = vsel %vm584, %v722, 0
  %v754 = vsel %vm584, %v723, 0
  %v757 = vsel %vm584, %v724, 0
  %v760 = vsel %vm584, %v725, 0
  %762 = vmatprep.subr.mxu0 0.0
  %763 = vmatpush1.msra.mxu0 %v714
  %764 = vmatprep.subr.mxu0 0.0
  %765 = vmatpush1.msra.mxu0 %v715
  %766 = vmatprep.subr.mxu0 0.0
  %767 = vmatpush1.msra.mxu0 %v716
  %768 = vmatprep.subr.mxu0 0.0
  %769 = vmatpush1.msra.mxu0 %v717
  %770 = vmatprep.subr.mxu0 0.0
  %771 = vmatpush1.msra.mxu0 %v718
  %772 = vmatprep.subr.mxu0 0.0
  %773 = vmatpush1.msra.mxu0 %v719
  %774 = vmatprep.subr.mxu0 0.0
  %775 = vmatpush1.msra.mxu0 %v720
  %776 = vmatprep.subr.mxu0 0.0
  %777 = vmatpush1.msra.mxu0 %v721
  %778 = vmatprep.subr.mxu0 0.0
  %779 = vmatpush1.msra.mxu0 0.0
  %780 = vmatprep.subr.mxu0 0.0
  %781 = vmatpush1.msra.mxu0 0.0
  %782 = vmatprep.subr.mxu0 0.0
  %783 = vmatpush1.msra.mxu0 0.0
  %784 = vmatprep.subr.mxu0 0.0
  %785 = vmatpush1.msra.mxu0 0.0
  %786 = vmatprep.subr.mxu0 0.0
  %787 = vmatpush1.msra.mxu0 0.0
  %788 = vmatprep.subr.mxu0 0.0
  %789 = vmatpush1.msra.mxu0 0.0
  %790 = vmatprep.subr.mxu0 0.0
  %791 = vmatpush1.msra.mxu0 0.0
  %792 = vmatprep.subr.mxu0 0.0
  %793 = vmatpush1.msra.mxu0 0.0
  %794 = vmatprep.subr.mxu0 0.0
  %795 = vmatpush1.msra.mxu0 0.0
  %796 = vmatprep.subr.mxu0 0.0
  %797 = vmatpush1.msra.mxu0 0.0
  %798 = vmatprep.subr.mxu0 0.0
  %799 = vmatpush1.msra.mxu0 0.0
  %800 = vmatprep.subr.mxu0 0.0
  %801 = vmatpush1.msra.mxu0 0.0
  %802 = vmatprep.subr.mxu0 0.0
  %803 = vmatpush1.msra.mxu0 0.0
  %804 = vmatprep.subr.mxu0 0.0
  %805 = vmatpush1.msra.mxu0 0.0
  %806 = vmatprep.subr.mxu0 0.0
  %807 = vmatpush1.msra.mxu0 0.0
  %808 = vmatprep.subr.mxu0 0.0
  %809 = vmatpush1.msra.mxu0 0.0
  %810 = vmatprep.subr.mxu0 0.0
  %811 = vmatpush1.msra.mxu0 0.0
  %812 = vmatprep.subr.mxu0 0.0
  %813 = vmatpush1.msra.mxu0 0.0
  %814 = vmatprep.subr.mxu0 0.0
  %815 = vmatpush1.msra.mxu0 0.0
  %816 = vmatprep.subr.mxu0 0.0
  %817 = vmatpush1.msra.mxu0 0.0
  %818 = vmatprep.subr.mxu0 0.0
  %819 = vmatpush1.msra.mxu0 0.0
  %820 = vmatprep.subr.mxu0 0.0
  %821 = vmatpush1.msra.mxu0 0.0
  %822 = vmatprep.subr.mxu0 0.0
  %823 = vmatpush1.msra.mxu0 0.0
  %824 = vmatprep.subr.mxu0 0.0
  %825 = vmatpush1.msra.mxu0 0.0
  %826 = vmatprep.mubr.f32.mxu0 0.0
  %827 = vmatmul.mubr.f32.gmra.mrb[0].mxu0 %v751
  %v828 = vpop.f32.mrb[0].mxu0
  %v829 = vadd.f32 %v733, %v828
  %v830 = vpop.f32.mrb[0].mxu0
  %831 = vmatprep.mubr.f32.mxu0 0.0
  %832 = vmatmul.mubr.f32.gmra.mrb[0].mxu0 %v754
  %v833 = vpop.f32.mrb[0].mxu0
  %v834 = vadd.f32 %v738, %v833
  %v835 = vpop.f32.mrb[0].mxu0
  %836 = vmatprep.mubr.f32.mxu0 0.0
  %837 = vmatmul.mubr.f32.gmra.mrb[0].mxu0 %v757
  %v838 = vpop.f32.mrb[0].mxu0
  %v839 = vadd.f32 %v743, %v838
  %v840 = vpop.f32.mrb[0].mxu0
  %841 = vmatprep.mubr.f32.mxu0 0.0
  %842 = vmatmul.mubr.f32.gmra.mrb[0].mxu0 %v760
  %v843 = vpop.f32.mrb[0].mxu0
  %v844 = vadd.f32 %v748, %v843
  %v845 = vpop.f32.mrb[0].mxu0
  %846 = vdwg.mxu0
  %v847 = vmax.f32 %v829, 0.0
  %v848 = vmax.f32 %v834, 0.0
  %v849 = vmax.f32 %v839, 0.0
  %v850 = vmax.f32 %v844, 0.0
  %v851 = vld [vmem:[%s9] sm:$0x3]
  %v852 = vld [vmem:[%s10] sm:$0x3]
  %854 = vset.pattern.permute.xlu0 0
  %855 = vperm.xlu0 %854, %v852
  %v856 = vpop.permute.xlu0 %855
  %vm858 = vcmask 261120
  %v860 = vsel %vm858, %v851, 0
  %862 = vmatprep.subr.mxu0 0.0
  %863 = vmatpush1.msra.mxu0 %v847
  %864 = vmatprep.subr.mxu0 0.0
  %865 = vmatpush1.msra.mxu0 %v848
  %866 = vmatprep.subr.mxu0 0.0
  %867 = vmatpush1.msra.mxu0 %v849
  %868 = vmatprep.subr.mxu0 0.0
  %869 = vmatpush1.msra.mxu0 %v850
  %870 = vmatprep.subr.mxu0 0.0
  %871 = vmatpush1.msra.mxu0 0.0
  %872 = vmatprep.subr.mxu0 0.0
  %873 = vmatpush1.msra.mxu0 0.0
  %874 = vmatprep.subr.mxu0 0.0
  %875 = vmatpush1.msra.mxu0 0.0
  %876 = vmatprep.subr.mxu0 0.0
  %877 = vmatpush1.msra.mxu0 0.0
  %878 = vmatprep.subr.mxu0 0.0
  %879 = vmatpush1.msra.mxu0 0.0
  %880 = vmatprep.subr.mxu0 0.0
  %881 = vmatpush1.msra.mxu0 0.0
  %882 = vmatprep.subr.mxu0 0.0
  %883 = vmatpush1.msra.mxu0 0.0
  %884 = vmatprep.subr.mxu0 0.0
  %885 = vmatpush1.msra.mxu0 0.0
  %886 = vmatprep.subr.mxu0 0.0
  %887 = vmatpush1.msra.mxu0 0.0
  %888 = vmatprep.subr.mxu0 0.0
  %889 = vmatpush1.msra.mxu0 0.0
  %890 = vmatprep.subr.mxu0 0.0
  %891 = vmatpush1.msra.mxu0 0.0
  %892 = vmatprep.subr.mxu0 0.0
  %893 = vmatpush1.msra.mxu0 0.0
  %894 = vmatprep.subr.mxu0 0.0
  %895 = vmatpush1.msra.mxu0 0.0
  %896 = vmatprep.subr.mxu0 0.0
  %897 = vmatpush1.msra.mxu0 0.0
  %898 = vmatprep.subr.mxu0 0.0
  %899 = vmatpush1.msra.mxu0 0.0
  %900 = vmatprep.subr.mxu0 0.0
  %901 = vmatpush1.msra.mxu0 0.0
  %902 = vmatprep.subr.mxu0 0.0
  %903 = vmatpush1.msra.mxu0 0.0
  %904 = vmatprep.subr.mxu0 0.0
  %905 = vmatpush1.msra.mxu0 0.0
  %906 = vmatprep.subr.mxu0 0.0
  %907 = vmatpush1.msra.mxu0 0.0
  %908 = vmatprep.subr.mxu0 0.0
  %909 = vmatpush1.msra.mxu0 0.0
  %910 = vmatprep.subr.mxu0 0.0
  %911 = vmatpush1.msra.mxu0 0.0
  %912 = vmatprep.subr.mxu0 0.0
  %913 = vmatpush1.msra.mxu0 0.0
  %914 = vmatprep.subr.mxu0 0.0
  %915 = vmatpush1.msra.mxu0 0.0
  %916 = vmatprep.subr.mxu0 0.0
  %917 = vmatpush1.msra.mxu0 0.0
  %918 = vmatprep.subr.mxu0 0.0
  %919 = vmatpush1.msra.mxu0 0.0
  %920 = vmatprep.subr.mxu0 0.0
  %921 = vmatpush1.msra.mxu0 0.0
  %922 = vmatprep.subr.mxu0 0.0
  %923 = vmatpush1.msra.mxu0 0.0
  %924 = vmatprep.subr.mxu0 0.0
  %925 = vmatpush1.msra.mxu0 0.0
  %926 = vmatprep.mubr.f32.mxu0 0.0
  %927 = vmatmul.mubr.f32.gmra.mrb[0].mxu0 %v860
  %v928 = vpop.f32.mrb[0].mxu0
  %v929 = vadd.f32 %v856, %v928
  %v930 = vpop.f32.mrb[0].mxu0
  %931 = vdwg.mxu0
  %v932 = vxor.u32 %v929, 2147483648
  %v933 = vmul.f32 %v932, 1.442695
  %v934 = vpow.pop %v933
  %v935 = vadd.f32 %v934, 1.0
  %v936 = vrcp.pop %v935
  %v937 = vmul.f32 1.0, %v936
  %938 = vst [vmem:[%s11] sm:$0x3] %v937
  // Predicated region
  $region46: #{colorization_forward.1} parent=0 // pred_check
    _
  $region47: #{colorization_forward.1} parent=0 // pred_check_branch
    %940 = sbr.rel (0) target = $region49
  $region48: #{colorization_forward.1} parent=0 // pred_region
    _
  $region49: #{colorization_forward.1} parent=0 // pred_fallthru
    _
  // Predicated region
  $region50: #{colorization_forward.1} parent=0 // pred_check
    _
  $region51: #{colorization_forward.1} parent=0 // pred_check_branch
    %942 = sbr.rel (0) target = $region53
  $region52: #{colorization_forward.1} parent=0 // pred_region
    _
  $region53: #{colorization_forward.1} parent=0 // pred_fallthru
    _

</llo_original>
